<compile_context>
chip_gen: v5e
topology: v5e:2x2
jax: 0.10.0
libtpu: 0.0.40
codegen_flags: <defaults>
</compile_context>

<pallas_src>
import functools
import math

import jax
import jax.numpy as jnp
from jax.experimental import pallas as pl
from jax.experimental.pallas import tpu as pltpu

# ---------------- deterministic "args" / "pr" configuration -----------------
TAU = 0.05
EPS = 1e-20
SKIP_NODE = True
SMOOTH = 1.0              # > 0 so the smooth-loss path is exercised
CYCLE_NUM = 2
BIDIRECTIONAL = True
SAMP_SR = 16000.0
MAX_DELAY = 0.001
PATCH_STRIDE = 8000.0
# floor(samp_sr * max_delay / patch_stride)
SKIP = int(math.floor(SAMP_SR * MAX_DELAY / PATCH_STRIDE))  # = 2

# "auto": bf16 MXU operands for the feat2mat matmul on v6e/v7x, f32 on v5e /
# unknown chips.  "f32" forces bit-parity-friendly numerics, "bf16" forces on.
MATMUL_PRECISION = "auto"

_NEG_INF = -1e20
_LANES = 128
_SUBLANES = 8


# ----------------------------- sizing helpers --------------------------------
def _round_up(x, m):
    return ((x + m - 1) // m) * m


def _per_batch_vmem_bytes(M, D):
    """Generous per-batch-element live-VMEM estimate (f32, tile-padded)."""
    pad_sub = max(_round_up(M, _SUBLANES), _SUBLANES)
    mm = pad_sub * max(_round_up(M, _LANES), _LANES) * 4
    md = pad_sub * max(_round_up(D, _LANES), _LANES) * 4
    return 12 * mm + 6 * md


def _tpu_vmem_bytes():
    try:
        return int(pltpu.get_tpu_info().vmem_capacity_bytes)
    except Exception:
        return 64 * 1024 * 1024   # conservative: v7x physical VMEM


def _use_bf16_matmul():
    if MATMUL_PRECISION == "bf16":
        return True
    if MATMUL_PRECISION == "f32":
        return False
    try:
        kind = jax.devices()[0].device_kind.lower()
    except Exception:
        return False
    if "v5" in kind:      # v5e: keep everything f32
        return False
    return ("v6" in kind) or ("v7" in kind) or ("tpu7" in kind)


def _pick_batch_block(N, M, D, budget_bytes):
    """Largest batch block the VMEM budget allows (cap 64), but keep at least
    2 grid steps when N >= 2 so both v7x TensorCores get work."""
    per_elem = max(_per_batch_vmem_bytes(M, D), 1)
    blk = max(1, min(64, N, budget_bytes // per_elem))
    if N >= 2:
        blk = min(blk, (N + 1) // 2)
    return blk


def _vmem_limit_bytes(n_blk, M, D, phys_vmem):
    est = 2 * n_blk * _per_batch_vmem_bytes(M, D) + (4 << 20)
    cap = (3 * phys_vmem) // 4     # 48 MiB on 64 MiB v7x, 96 MiB on 128 MiB v5e/v6e
    return int(min(cap, max(16 << 20, est)))


# --------------------------------- kernel ------------------------------------
def stereo_crw_kernel(left_ref, right_ref, delay_ref, out_ref, *,
                      N_true, n_blk, M, ce_skip, band_skip, cycle_num, tau, eps,
                      samp_sr, bidirectional, compute_smooth, mask_batch,
                      use_xlu_transpose, skip_row_max, mm_bf16):
    """Fused StereoCRW loss partial sums for one batch block."""
    B = left_ref.shape[0]
    fl = left_ref[...].astype(jnp.float32)     # (B, M, D)
    fr = right_ref[...].astype(jnp.float32)    # (B, M, D)

    # F.normalize(p=2, dim=-1): x / max(||x||, 1e-12) == x * rsqrt(max(||x||^2, 1e-24))
    fl = fl * jax.lax.rsqrt(jnp.maximum(jnp.sum(fl * fl, axis=-1, keepdims=True), 1e-24))
    fr = fr * jax.lax.rsqrt(jnp.maximum(jnp.sum(fr * fr, axis=-1, keepdims=True), 1e-24))

    def mm_cast(x):
        # bf16 operands only for the feat2mat matmul; f32 accumulation either way.
        return x.astype(jnp.bfloat16) if mm_bf16 else x

    def softmax_last(x):
        # Row-max subtraction skipped when logits are bounded (L2-normalized
        # features => |aff| <= 1/tau); -1e20 band entries still underflow to 0.
        if not skip_row_max:
            x = x - jnp.max(x, axis=-1, keepdims=True)
        e = jnp.exp(x)
        # EUP reciprocal instead of a VALU divide on an MxM operand.
        return e * pl.reciprocal(jnp.sum(e, axis=-1, keepdims=True), approx=True)

    inv_tau = jnp.float32(1.0 / tau)
    aff_L2R = jnp.einsum('bmd,bnd->bmn', mm_cast(fl), mm_cast(fr),
                         preferred_element_type=jnp.float32) * inv_tau
    if use_xlu_transpose:
        # aff_R2L == aff_L2R^T exactly; XLU transpose instead of a 2nd MXU matmul.
        aff_R2L = jnp.swapaxes(aff_L2R, -1, -2)
    else:
        aff_R2L = jnp.einsum('bmd,bnd->bmn', mm_cast(fr), mm_cast(fl),
                             preferred_element_type=jnp.float32) * inv_tau

    A1 = softmax_last(aff_L2R)                 # softmax(aff_L2R, -1)
    A2 = softmax_last(aff_R2L)                 # softmax(aff_R2L, -1)

    # Shared iota helpers (built once, reused by both loss terms).
    rid = jax.lax.broadcasted_iota(jnp.int32, (M, M), 0)
    cid = jax.lax.broadcasted_iota(jnp.int32, (M, M), 1)
    lane_m = jax.lax.broadcasted_iota(jnp.int32, (1, M), 1)

    if mask_batch:
        bidx = jax.lax.broadcasted_iota(jnp.int32, (B, 1), 0)
        bvalid = (pl.program_id(0) * n_blk + bidx) < N_true        # (B, 1) bool
    else:
        bvalid = None

    fast_pow2 = (cycle_num == 2) and use_xlu_transpose

    def cycle_ce_sum(Ax, Ay):
        # cycle matrix: one MXU matmul (f32 probability chain kept in f32).
        C = jnp.einsum('bik,bkj->bij', Ax, Ay, preferred_element_type=jnp.float32)
        if cycle_num == 1:
            rowsum = jnp.sum(C, axis=-1)
            diag = jnp.sum(jnp.where(rid == cid, C, 0.0), axis=-1)
        elif fast_pow2:
            # cycle_num == 2: avoid the second O(M^3) matmul entirely.
            r = jnp.sum(C, axis=-1)                               # (B, M)
            rowsum = jnp.sum(C * r[:, None, :], axis=-1)          # rowsum(C@C)
            Ct = jnp.swapaxes(C, -1, -2)
            diag = jnp.sum(C * Ct, axis=-1)                       # diag(C@C)
        else:
            P = C
            for _ in range(cycle_num - 1):
                P = jnp.einsum('bik,bkj->bij', P, C,
                               preferred_element_type=jnp.float32)
            rowsum = jnp.sum(P, axis=-1)
            diag = jnp.sum(jnp.where(rid == cid, P, 0.0), axis=-1)
        # CrossEntropy rows with diagonal labels on log(P + eps):
        #   logsumexp_j log(P_ij + eps) == log(rowsum_i + M*eps)
        #   target logit               == log(P_ii + eps)
        ce_rows = jnp.log(rowsum + M * eps) - jnp.log(diag + eps)
        valid = (lane_m >= ce_skip) & (lane_m < M - ce_skip)       # skip_node rows
        if bvalid is not None:
            valid = valid & bvalid
        return jnp.sum(jnp.where(valid, ce_rows, 0.0))

    ce_total = cycle_ce_sum(A1, A2)
    if bidirectional:
        ce_total = ce_total + cycle_ce_sum(A2, A1)

    if compute_smooth:
        # crw_itd_estimation: banded-diagonal masked softmax of aff_L2R.
        # Faithful to torch: exact zeros inside the band are also masked
        # (masked_aff[masked_aff == 0] = -1e20).
        band = jnp.abs(rid - cid) <= band_skip                     # (M, M) bool
        masked = jnp.where(band & (aff_L2R != 0.0), aff_L2R,
                           jnp.float32(_NEG_INF))                  # (B, M, M)
        Pm = softmax_last(masked)
        dt = delay_ref[...].astype(jnp.float32) * samp_sr          # (B, 1, M)
        itd = jnp.sum(Pm * dt, axis=-1)                            # (B, M)
        # Adjacent difference on the tiny (B, M) vector.
        d = itd[:, :-1] - itd[:, 1:]                               # (B, M-1)
        ad = jnp.abs(d)
        hub = jnp.where(ad < 1.0, 0.5 * d * d, ad - 0.5)           # SmoothL1, beta=1
        lane_d = jax.lax.broadcasted_iota(jnp.int32, (1, M - 1), 1)
        dvalid = (lane_d >= band_skip) & (lane_d < M - band_skip - 1)
        if bvalid is not None:
            dvalid = dvalid & bvalid
        hub_total = jnp.sum(jnp.where(dvalid, hub, 0.0))
    else:
        hub_total = jnp.float32(0.0)

    # Single lane-dense output row: lane 0 = ce partial sum, lane 1 = huber.
    lane = jax.lax.broadcasted_iota(jnp.int32, (1, 1, _LANES), 2)
    out_ref[...] = jnp.where(lane == 0, ce_total,
                             jnp.where(lane == 1, hub_total, 0.0)).astype(jnp.float32)


# -------------------------------- wrapper -------------------------------------
def stereo_crw_loss(feat_left, feat_right, delay_time):
    N, M, D = feat_left.shape
    ce_skip = SKIP if SKIP_NODE else 0     # single flag drives kernel & divisor
    band_skip = SKIP                       # ITD band always uses max_delay_offset
    assert CYCLE_NUM >= 1
    assert M - 2 * ce_skip >= 1, "need at least one row after skip_node slicing"
    if SMOOTH > 0:
        assert M - 2 * band_skip >= 2, "smooth loss needs >= 2 rows after ITD slicing"

    phys_vmem = _tpu_vmem_bytes()
    n_blk = _pick_batch_block(N, M, D, (3 * phys_vmem) // 8)
    n_steps = -(-N // n_blk)
    N_pad = n_steps * n_blk

    if N_pad != N:
        pad = ((0, N_pad - N), (0, 0), (0, 0))
        # edge-pad (replicate last batch element) so padded rows are numerically
        # benign; their contributions are masked out inside the kernel.
        feat_left = jnp.pad(feat_left, pad, mode='edge')
        feat_right = jnp.pad(feat_right, pad, mode='edge')
        delay_time = jnp.pad(delay_time, pad, mode='edge')

    kernel = functools.partial(
        stereo_crw_kernel,
        N_true=N, n_blk=n_blk, M=M, ce_skip=ce_skip, band_skip=band_skip,
        cycle_num=CYCLE_NUM, tau=TAU, eps=EPS, samp_sr=SAMP_SR,
        bidirectional=BIDIRECTIONAL, compute_smooth=SMOOTH > 0,
        mask_batch=(N_pad != N),
        use_xlu_transpose=(M % 8 == 0),
        skip_row_max=(1.0 / TAU) <= 60.0,
        mm_bf16=_use_bf16_matmul())

    sums = pl.pallas_call(
        kernel,
        out_shape=jax.ShapeDtypeStruct((n_steps, 1, _LANES), jnp.float32),
        grid=(n_steps,),
        in_specs=[
            pl.BlockSpec((n_blk, M, D), lambda b: (b, 0, 0)),
            pl.BlockSpec((n_blk, M, D), lambda b: (b, 0, 0)),
            pl.BlockSpec((n_blk, 1, M), lambda b: (b, 0, 0)),
        ],
        out_specs=pl.BlockSpec((1, 1, _LANES), lambda b: (b, 0, 0)),
        compiler_params=pltpu.CompilerParams(
            dimension_semantics=("parallel",),
            vmem_limit_bytes=_vmem_limit_bytes(n_blk, M, D, phys_vmem)),
    )(feat_left, feat_right, delay_time)

    ce_total = jnp.sum(sums[:, 0, 0])
    hub_total = jnp.sum(sums[:, 0, 1])

    n_dir = 2 if BIDIRECTIONAL else 1
    ms_ce = M - 2 * ce_skip
    # CrossEntropyLoss(reduction='mean') over all (N * n_dir * ms_ce) rows
    crw_loss = ce_total / (N * n_dir * ms_ce)
    if SMOOTH > 0:
        ms_band = M - 2 * band_skip
        # SmoothL1Loss mean over N * (ms_band - 1) elements, scaled by smooth
        smooth_loss = SMOOTH * hub_total / (N * (ms_band - 1))
    else:
        smooth_loss = jnp.float32(0.0)
    return crw_loss + smooth_loss


if __name__ == "__main__":
    key = jax.random.PRNGKey(0)
    k1, k2, k3 = jax.random.split(key, 3)

    N, M, D = 2, 8, 32   # batch, patches (seq), feature dim
    feat_left = jax.random.normal(k1, (N, M, D), dtype=jnp.float32)
    feat_right = jax.random.normal(k2, (N, M, D), dtype=jnp.float32)
    # delay time per right-patch, in seconds, within +/- max_delay
    delay_time = jax.random.uniform(
        k3, (N, 1, M), minval=-MAX_DELAY, maxval=MAX_DELAY, dtype=jnp.float32)

    loss = jax.jit(stereo_crw_loss)(feat_left, feat_right, delay_time)
    jax.block_until_ready(loss)
    assert jnp.isfinite(loss)
    print("KERNEL_OK")
</pallas_src>

<mosaic_0001>
module attributes {stable_mosaic.version = 11 : i64} {
  func.func @stereo_crw_kernel(%arg0: i32, %arg1: memref<1x8x32xf32, #tpu.memory_space<vmem>>, %arg2: memref<1x8x32xf32, #tpu.memory_space<vmem>>, %arg3: memref<1x1x8xf32, #tpu.memory_space<vmem>>, %arg4: memref<1x1x128xf32, #tpu.memory_space<vmem>>) attributes {dimension_semantics = [#tpu.dimension_semantics<parallel>], iteration_bounds = array<i64: 2>, scalar_prefetch = 0 : i64, scratch_operands = 0 : i64, tpu.core_type = #tpu.core_type<tc>, window_params = [{transform_indices = @transform_0, window_bounds = array<i64: 1, 8, 32>}, {transform_indices = @transform_1, window_bounds = array<i64: 1, 8, 32>}, {transform_indices = @transform_2, window_bounds = array<i64: 1, 1, 8>}, {transform_indices = @transform_3, window_bounds = array<i64: 1, 1, 128>}]} {
    %c0 = arith.constant 0 : index
    %c0_0 = arith.constant 0 : index
    %c0_1 = arith.constant 0 : index
    %0 = vector.load %arg1[%c0, %c0_0, %c0_1] : memref<1x8x32xf32, #tpu.memory_space<vmem>>, vector<1x8x32xf32>
    %c0_2 = arith.constant 0 : index
    %c0_3 = arith.constant 0 : index
    %c0_4 = arith.constant 0 : index
    %1 = vector.load %arg2[%c0_2, %c0_3, %c0_4] : memref<1x8x32xf32, #tpu.memory_space<vmem>>, vector<1x8x32xf32>
    %2 = arith.mulf %0, %0 : vector<1x8x32xf32>
    %cst = arith.constant dense<0.000000e+00> : vector<1x8xf32>
    %3 = vector.multi_reduction <add>, %2, %cst [2] : vector<1x8x32xf32> to vector<1x8xf32>
    %4 = vector.shape_cast %3 : vector<1x8xf32> to vector<1x8x1xf32>
    %cst_5 = arith.constant 1.000000e-24 : f32
    %5 = vector.broadcast %cst_5 : f32 to vector<1x8x1xf32>
    %6 = arith.maximumf %4, %5 : vector<1x8x1xf32>
    %7 = math.rsqrt %6 : vector<1x8x1xf32>
    %8 = vector.broadcast %7 : vector<1x8x1xf32> to vector<1x8x32xf32>
    %9 = arith.mulf %0, %8 : vector<1x8x32xf32>
    %10 = arith.mulf %1, %1 : vector<1x8x32xf32>
    %cst_6 = arith.constant dense<0.000000e+00> : vector<1x8xf32>
    %11 = vector.multi_reduction <add>, %10, %cst_6 [2] : vector<1x8x32xf32> to vector<1x8xf32>
    %12 = vector.shape_cast %11 : vector<1x8xf32> to vector<1x8x1xf32>
    %cst_7 = arith.constant 1.000000e-24 : f32
    %13 = vector.broadcast %cst_7 : f32 to vector<1x8x1xf32>
    %14 = arith.maximumf %12, %13 : vector<1x8x1xf32>
    %15 = math.rsqrt %14 : vector<1x8x1xf32>
    %16 = vector.broadcast %15 : vector<1x8x1xf32> to vector<1x8x32xf32>
    %17 = arith.mulf %1, %16 : vector<1x8x32xf32>
    "tpu.trace_start"() <{level = 10 : i32, message = "bmd,bnd->bmn"}> : () -> ()
    %cst_8 = arith.constant dense<0.000000e+00> : vector<1x8x8xf32>
    %18 = tpu.matmul %9, %17, %cst_8 {dimension_numbers = #tpu.dot_dimension_numbers<[2], [2], [1], [1], [0, 0, 0, 1, 1, 1], [0], [0]>} : vector<1x8x32xf32>, vector<1x8x32xf32>, vector<1x8x8xf32> -> vector<1x8x8xf32>
    "tpu.trace_stop"() : () -> ()
    %cst_9 = arith.constant 2.000000e+01 : f32
    %19 = vector.broadcast %cst_9 : f32 to vector<1x8x8xf32>
    %20 = arith.mulf %18, %19 : vector<1x8x8xf32>
    %21 = tpu.transpose %20, [0, 2, 1] : vector<1x8x8xf32> -> vector<1x8x8xf32>
    %22 = math.exp %20 : vector<1x8x8xf32>
    %cst_10 = arith.constant dense<0.000000e+00> : vector<1x8xf32>
    %23 = vector.multi_reduction <add>, %22, %cst_10 [2] : vector<1x8x8xf32> to vector<1x8xf32>
    %24 = vector.shape_cast %23 : vector<1x8xf32> to vector<1x8x1xf32>
    %25 = tpu.reciprocal %24 {approx = true} : vector<1x8x1xf32> -> vector<1x8x1xf32>
    %26 = vector.broadcast %25 : vector<1x8x1xf32> to vector<1x8x8xf32>
    %27 = arith.mulf %22, %26 : vector<1x8x8xf32>
    %28 = math.exp %21 : vector<1x8x8xf32>
    %cst_11 = arith.constant dense<0.000000e+00> : vector<1x8xf32>
    %29 = vector.multi_reduction <add>, %28, %cst_11 [2] : vector<1x8x8xf32> to vector<1x8xf32>
    %30 = vector.shape_cast %29 : vector<1x8xf32> to vector<1x8x1xf32>
    %31 = tpu.reciprocal %30 {approx = true} : vector<1x8x1xf32> -> vector<1x8x1xf32>
    %32 = vector.broadcast %31 : vector<1x8x1xf32> to vector<1x8x8xf32>
    %33 = arith.mulf %28, %32 : vector<1x8x8xf32>
    %34 = tpu.iota {dimensions = array<i32: 0>} : vector<8x8xi32>
    %35 = tpu.iota {dimensions = array<i32: 1>} : vector<8x8xi32>
    %36 = tpu.iota {dimensions = array<i32: 1>} : vector<1x8xi32>
    "tpu.trace_start"() <{level = 10 : i32, message = "bik,bkj->bij"}> : () -> ()
    %cst_12 = arith.constant dense<0.000000e+00> : vector<1x8x8xf32>
    %37 = tpu.matmul %27, %33, %cst_12 {dimension_numbers = #tpu.dot_dimension_numbers<[2], [1], [1], [2], [0, 0, 0, 1, 1, 2], [0], [0]>} : vector<1x8x8xf32>, vector<1x8x8xf32>, vector<1x8x8xf32> -> vector<1x8x8xf32>
    "tpu.trace_stop"() : () -> ()
    %cst_13 = arith.constant dense<0.000000e+00> : vector<1x8xf32>
    %38 = vector.multi_reduction <add>, %37, %cst_13 [2] : vector<1x8x8xf32> to vector<1x8xf32>
    %39 = vector.shape_cast %38 : vector<1x8xf32> to vector<1x1x8xf32>
    %40 = vector.broadcast %39 : vector<1x1x8xf32> to vector<1x8x8xf32>
    %41 = arith.mulf %37, %40 : vector<1x8x8xf32>
    %cst_14 = arith.constant dense<0.000000e+00> : vector<1x8xf32>
    %42 = vector.multi_reduction <add>, %41, %cst_14 [2] : vector<1x8x8xf32> to vector<1x8xf32>
    %43 = tpu.transpose %37, [0, 2, 1] : vector<1x8x8xf32> -> vector<1x8x8xf32>
    %44 = arith.mulf %37, %43 : vector<1x8x8xf32>
    %cst_15 = arith.constant dense<0.000000e+00> : vector<1x8xf32>
    %45 = vector.multi_reduction <add>, %44, %cst_15 [2] : vector<1x8x8xf32> to vector<1x8xf32>
    %cst_16 = arith.constant 7.99999975E-20 : f32
    %46 = vector.broadcast %cst_16 : f32 to vector<1x8xf32>
    %47 = arith.addf %42, %46 : vector<1x8xf32>
    %48 = math.log %47 : vector<1x8xf32>
    %cst_17 = arith.constant 9.99999968E-21 : f32
    %49 = vector.broadcast %cst_17 : f32 to vector<1x8xf32>
    %50 = arith.addf %45, %49 : vector<1x8xf32>
    %51 = math.log %50 : vector<1x8xf32>
    %52 = arith.subf %48, %51 : vector<1x8xf32>
    %c0_i32 = arith.constant 0 : i32
    %53 = vector.broadcast %c0_i32 : i32 to vector<1x8xi32>
    %54 = arith.cmpi sge, %36, %53 : vector<1x8xi32>
    %c8_i32 = arith.constant 8 : i32
    %55 = vector.broadcast %c8_i32 : i32 to vector<1x8xi32>
    %56 = arith.cmpi slt, %36, %55 : vector<1x8xi32>
    %57 = arith.andi %54, %56 : vector<1x8xi1>
    %cst_18 = arith.constant 0.000000e+00 : f32
    %58 = vector.broadcast %cst_18 : f32 to vector<1x8xf32>
    %59 = arith.select %57, %52, %58 : vector<1x8xi1>, vector<1x8xf32>
    %60 = vector.shape_cast %59 : vector<1x8xf32> to vector<1x1x8xf32>
    %cst_19 = arith.constant dense<0.000000e+00> : vector<1xf32>
    %61 = vector.multi_reduction <add>, %60, %cst_19 [1, 2] : vector<1x1x8xf32> to vector<1xf32>
    %62 = vector.shape_cast %61 : vector<1xf32> to vector<1x1x1xf32>
    %63 = vector.extract %62[0, 0, 0] : f32 from vector<1x1x1xf32>
    "tpu.trace_start"() <{level = 10 : i32, message = "bik,bkj->bij"}> : () -> ()
    %cst_20 = arith.constant dense<0.000000e+00> : vector<1x8x8xf32>
    %64 = tpu.matmul %33, %27, %cst_20 {dimension_numbers = #tpu.dot_dimension_numbers<[2], [1], [1], [2], [0, 0, 0, 1, 1, 2], [0], [0]>} : vector<1x8x8xf32>, vector<1x8x8xf32>, vector<1x8x8xf32> -> vector<1x8x8xf32>
    "tpu.trace_stop"() : () -> ()
    %cst_21 = arith.constant dense<0.000000e+00> : vector<1x8xf32>
    %65 = vector.multi_reduction <add>, %64, %cst_21 [2] : vector<1x8x8xf32> to vector<1x8xf32>
    %66 = vector.shape_cast %65 : vector<1x8xf32> to vector<1x1x8xf32>
    %67 = vector.broadcast %66 : vector<1x1x8xf32> to vector<1x8x8xf32>
    %68 = arith.mulf %64, %67 : vector<1x8x8xf32>
    %cst_22 = arith.constant dense<0.000000e+00> : vector<1x8xf32>
    %69 = vector.multi_reduction <add>, %68, %cst_22 [2] : vector<1x8x8xf32> to vector<1x8xf32>
    %70 = tpu.transpose %64, [0, 2, 1] : vector<1x8x8xf32> -> vector<1x8x8xf32>
    %71 = arith.mulf %64, %70 : vector<1x8x8xf32>
    %cst_23 = arith.constant dense<0.000000e+00> : vector<1x8xf32>
    %72 = vector.multi_reduction <add>, %71, %cst_23 [2] : vector<1x8x8xf32> to vector<1x8xf32>
    %cst_24 = arith.constant 7.99999975E-20 : f32
    %73 = vector.broadcast %cst_24 : f32 to vector<1x8xf32>
    %74 = arith.addf %69, %73 : vector<1x8xf32>
    %75 = math.log %74 : vector<1x8xf32>
    %cst_25 = arith.constant 9.99999968E-21 : f32
    %76 = vector.broadcast %cst_25 : f32 to vector<1x8xf32>
    %77 = arith.addf %72, %76 : vector<1x8xf32>
    %78 = math.log %77 : vector<1x8xf32>
    %79 = arith.subf %75, %78 : vector<1x8xf32>
    %c0_i32_26 = arith.constant 0 : i32
    %80 = vector.broadcast %c0_i32_26 : i32 to vector<1x8xi32>
    %81 = arith.cmpi sge, %36, %80 : vector<1x8xi32>
    %c8_i32_27 = arith.constant 8 : i32
    %82 = vector.broadcast %c8_i32_27 : i32 to vector<1x8xi32>
    %83 = arith.cmpi slt, %36, %82 : vector<1x8xi32>
    %84 = arith.andi %81, %83 : vector<1x8xi1>
    %cst_28 = arith.constant 0.000000e+00 : f32
    %85 = vector.broadcast %cst_28 : f32 to vector<1x8xf32>
    %86 = arith.select %84, %79, %85 : vector<1x8xi1>, vector<1x8xf32>
    %87 = vector.shape_cast %86 : vector<1x8xf32> to vector<1x1x8xf32>
    %cst_29 = arith.constant dense<0.000000e+00> : vector<1xf32>
    %88 = vector.multi_reduction <add>, %87, %cst_29 [1, 2] : vector<1x1x8xf32> to vector<1xf32>
    %89 = vector.shape_cast %88 : vector<1xf32> to vector<1x1x1xf32>
    %90 = vector.extract %89[0, 0, 0] : f32 from vector<1x1x1xf32>
    %91 = arith.addf %63, %90 : f32
    %92 = arith.subi %34, %35 : vector<8x8xi32>
    %93 = math.absi %92 : vector<8x8xi32>
    %c0_i32_30 = arith.constant 0 : i32
    %94 = vector.broadcast %c0_i32_30 : i32 to vector<8x8xi32>
    %95 = arith.cmpi sle, %93, %94 : vector<8x8xi32>
    %cst_31 = arith.constant 0.000000e+00 : f32
    %96 = vector.broadcast %cst_31 : f32 to vector<1x8x8xf32>
    %97 = arith.cmpf one, %20, %96 : vector<1x8x8xf32>
    %98 = vector.shape_cast %95 : vector<8x8xi1> to vector<1x8x8xi1>
    %99 = arith.andi %98, %97 : vector<1x8x8xi1>
    %cst_32 = arith.constant -1.000000e+20 : f32
    %100 = vector.broadcast %cst_32 : f32 to vector<1x8x8xf32>
    %101 = arith.select %99, %20, %100 : vector<1x8x8xi1>, vector<1x8x8xf32>
    %102 = math.exp %101 : vector<1x8x8xf32>
    %cst_33 = arith.constant dense<0.000000e+00> : vector<1x8xf32>
    %103 = vector.multi_reduction <add>, %102, %cst_33 [2] : vector<1x8x8xf32> to vector<1x8xf32>
    %104 = vector.shape_cast %103 : vector<1x8xf32> to vector<1x8x1xf32>
    %105 = tpu.reciprocal %104 {approx = true} : vector<1x8x1xf32> -> vector<1x8x1xf32>
    %106 = vector.broadcast %105 : vector<1x8x1xf32> to vector<1x8x8xf32>
    %107 = arith.mulf %102, %106 : vector<1x8x8xf32>
    %c0_34 = arith.constant 0 : index
    %c0_35 = arith.constant 0 : index
    %c0_36 = arith.constant 0 : index
    %108 = vector.load %arg3[%c0_34, %c0_35, %c0_36] : memref<1x1x8xf32, #tpu.memory_space<vmem>>, vector<1x1x8xf32>
    %cst_37 = arith.constant 1.600000e+04 : f32
    %109 = vector.broadcast %cst_37 : f32 to vector<1x1x8xf32>
    %110 = arith.mulf %108, %109 : vector<1x1x8xf32>
    %111 = vector.broadcast %110 : vector<1x1x8xf32> to vector<1x8x8xf32>
    %112 = arith.mulf %107, %111 : vector<1x8x8xf32>
    %cst_38 = arith.constant dense<0.000000e+00> : vector<1x8xf32>
    %113 = vector.multi_reduction <add>, %112, %cst_38 [2] : vector<1x8x8xf32> to vector<1x8xf32>
    %114 = vector.extract_strided_slice %113 {offsets = [0, 0], sizes = [1, 7], strides = [1, 1]} : vector<1x8xf32> to vector<1x7xf32>
    %115 = vector.extract_strided_slice %113 {offsets = [0, 1], sizes = [1, 7], strides = [1, 1]} : vector<1x8xf32> to vector<1x7xf32>
    %116 = arith.subf %114, %115 : vector<1x7xf32>
    %117 = math.absf %116 : vector<1x7xf32>
    %cst_39 = arith.constant 1.000000e+00 : f32
    %118 = vector.broadcast %cst_39 : f32 to vector<1x7xf32>
    %119 = arith.cmpf olt, %117, %118 : vector<1x7xf32>
    %cst_40 = arith.constant 5.000000e-01 : f32
    %120 = vector.broadcast %cst_40 : f32 to vector<1x7xf32>
    %121 = arith.mulf %120, %116 : vector<1x7xf32>
    %122 = arith.mulf %121, %116 : vector<1x7xf32>
    %cst_41 = arith.constant 5.000000e-01 : f32
    %123 = vector.broadcast %cst_41 : f32 to vector<1x7xf32>
    %124 = arith.subf %117, %123 : vector<1x7xf32>
    %125 = arith.select %119, %122, %124 : vector<1x7xi1>, vector<1x7xf32>
    %126 = tpu.iota {dimensions = array<i32: 1>} : vector<1x7xi32>
    %c0_i32_42 = arith.constant 0 : i32
    %127 = vector.broadcast %c0_i32_42 : i32 to vector<1x7xi32>
    %128 = arith.cmpi sge, %126, %127 : vector<1x7xi32>
    %c7_i32 = arith.constant 7 : i32
    %129 = vector.broadcast %c7_i32 : i32 to vector<1x7xi32>
    %130 = arith.cmpi slt, %126, %129 : vector<1x7xi32>
    %131 = arith.andi %128, %130 : vector<1x7xi1>
    %cst_43 = arith.constant 0.000000e+00 : f32
    %132 = vector.broadcast %cst_43 : f32 to vector<1x7xf32>
    %133 = arith.select %131, %125, %132 : vector<1x7xi1>, vector<1x7xf32>
    %134 = vector.shape_cast %133 : vector<1x7xf32> to vector<1x1x7xf32>
    %cst_44 = arith.constant dense<0.000000e+00> : vector<1xf32>
    %135 = vector.multi_reduction <add>, %134, %cst_44 [1, 2] : vector<1x1x7xf32> to vector<1xf32>
    %136 = vector.shape_cast %135 : vector<1xf32> to vector<1x1x1xf32>
    %137 = vector.extract %136[0, 0, 0] : f32 from vector<1x1x1xf32>
    %138 = tpu.iota {dimensions = array<i32: 2>} : vector<1x1x128xi32>
    %c0_i32_45 = arith.constant 0 : i32
    %139 = vector.broadcast %c0_i32_45 : i32 to vector<1x1x128xi32>
    %140 = arith.cmpi eq, %138, %139 : vector<1x1x128xi32>
    %c1_i32 = arith.constant 1 : i32
    %141 = vector.broadcast %c1_i32 : i32 to vector<1x1x128xi32>
    %142 = arith.cmpi eq, %138, %141 : vector<1x1x128xi32>
    %cst_46 = arith.constant 0.000000e+00 : f32
    %143 = vector.broadcast %137 : f32 to vector<1x1x128xf32>
    %144 = vector.broadcast %cst_46 : f32 to vector<1x1x128xf32>
    %145 = arith.select %142, %143, %144 : vector<1x1x128xi1>, vector<1x1x128xf32>
    %146 = vector.broadcast %91 : f32 to vector<1x1x128xf32>
    %147 = arith.select %140, %146, %145 : vector<1x1x128xi1>, vector<1x1x128xf32>
    %c0_47 = arith.constant 0 : index
    %c0_48 = arith.constant 0 : index
    %c0_49 = arith.constant 0 : index
    %148 = vector.load %arg4[%c0_47, %c0_48, %c0_49] : memref<1x1x128xf32, #tpu.memory_space<vmem>>, vector<1x1x128xf32>
    tpu.vector_store %arg4[%c0_47, %c0_48, %c0_49], %147 {strides = array<i32>} : memref<1x1x128xf32, #tpu.memory_space<vmem>>, vector<1x1x128xf32>,
    return
  }
  func.func @transform_0(%arg0: i32) -> (i32, i32, i32) {
    %c0_i32 = arith.constant 0 : i32
    %c0_i32_0 = arith.constant 0 : i32
    %c0_i32_1 = arith.constant 0 : i32
    return %arg0, %c0_i32, %c0_i32_0 : i32, i32, i32
  }
  func.func @transform_1(%arg0: i32) -> (i32, i32, i32) {
    %c0_i32 = arith.constant 0 : i32
    %c0_i32_0 = arith.constant 0 : i32
    %c0_i32_1 = arith.constant 0 : i32
    return %arg0, %c0_i32, %c0_i32_0 : i32, i32, i32
  }
  func.func @transform_2(%arg0: i32) -> (i32, i32, i32) {
    %c0_i32 = arith.constant 0 : i32
    %c0_i32_0 = arith.constant 0 : i32
    %c0_i32_1 = arith.constant 0 : i32
    return %arg0, %c0_i32, %c0_i32_0 : i32, i32, i32
  }
  func.func @transform_3(%arg0: i32) -> (i32, i32, i32) {
    %c0_i32 = arith.constant 0 : i32
    %c0_i32_0 = arith.constant 0 : i32
    %c0_i32_1 = arith.constant 0 : i32
    return %arg0, %c0_i32, %c0_i32_0 : i32, i32, i32
  }
}

</mosaic_0001>

<llo_original>
// kernel: stereo_crw_loss.1
$region0: #{stereo_crw_loss.1}
  #allocation0 [shape = 'u32[]', space=smem, size = 0x4, offset = 0x4, fixed_abs, tag = 'smem constant byte address 0x4 - core index']
  #allocation1 [shape = 'u32[72,128]{1,0:T(1,128)}', space=vmem, size = 0x9000, scoped, tag = 'internal scratch']
  %s0 = inlined_call_operand.hbm [shape: f32[2,8,32], index: 0, kind: input, shape index: {}]
  %s1 = inlined_call_operand.hbm [shape: f32[2,8,32], index: 1, kind: input, shape index: {}]
  %s2 = inlined_call_operand.hbm [shape: f32[2,1,8], index: 2, kind: input, shape index: {}]
  %s3 = inlined_call_operand.vmem [shape: f32[2,1,128], index: 3, kind: output, shape index: {}]
  %s4 = sld [smem:[#allocation0]]
  $region57: #{stereo_crw_loss.1} parent=0
    _
  %s6 = ssub.s32 1, %s4
  %s7 = scalar_select 0, %s6, %s4
  $region1: #{stereo_crw_loss.1} parent=0
    #allocation2 [shape = 'u8[8192]{0}', space=vmem, size = 0x2000, scoped, tag = 'input window, operand 0']
    #allocation3 [shape = 's32[2]{0}', space=sflag, size = 0x8, scoped, tag = 'scoped memory for stereo_crw_loss.1']
    #allocation4 [shape = 'u8[8192]{0}', space=vmem, size = 0x2000, scoped, tag = 'input window, operand 1']
    #allocation5 [shape = 's32[2]{0}', space=sflag, size = 0x8, scoped, tag = 'scoped memory for stereo_crw_loss.1']
    #allocation6 [shape = 'u8[1024]{0}', space=vmem, size = 0x400, scoped, tag = 'input window, operand 2']
    %8 = vsyncpa [#allocation3], 0
    %s9 = scalar_lea.sflag [#allocation3], 1
    %10 = vsyncpa %s9, 0
    %11 = vsyncpa [#allocation5], 0
    %s12 = scalar_lea.sflag [#allocation5], 1
    %13 = vsyncpa %s12, 0
    loop: start=0, step=1, limit=4
    $region2: #{stereo_crw_loss.1} parent=1 // loop_pre_header
      _
    $region3: #{stereo_crw_loss.1} parent=1 // loop_header
      %s15 = sphi 0, %s19
      %p16 = scmp.ge.s32.totalorder %s15, 4
      %s25 = sphi 0, %s27
      %s28 = sphi 0, %s25
      %s29 = sphi 0, %s28
      %s45 = sphi 0, %s29
      %s51 = sphi 0, %s53
      %s54 = sphi 0, %s51
      %s55 = sphi 0, %s54
      %s71 = sphi 0, %s55
      %s77 = sphi 0, %s79
      %s80 = sphi 0, %s77
      %s81 = sphi 0, %s80
      %s97 = sphi 0, %s81
      %s103 = sphi 0, %s105
      %s106 = sphi 0, %s103
      %s107 = sphi 0, %s106
      %s123 = sphi 0, %s107
    $region4: #{stereo_crw_loss.1} parent=1 // loop_header_branch
      %18 = sbr.rel (%p16) target = $region8
    $region5: #{stereo_crw_loss.1} parent=1 // loop_body
      %s20 = ssub.s32 %s15, 1
      %s21 = ssub.s32 %s15, 2
      %s22 = sadd.s32 %s15, 1
      %s23 = ssub.s32 %s15, %s22
      %p24 = scmp.eq.s32.totalorder %s23, 0
      %s26 = sadd.s32 %s25, 1
      %s27 = scalar_select %p24, %s25, %s26
      %p30 = pneg %p24
      %p31 = scmp.eq.s32.totalorder %s15, 1
      %p32 = por %p30, %p31
      %p33 = scmp.ne.s32.totalorder %s25, %s28
      %p34 = scmp.eq.s32.totalorder %s15, 0
      %p35 = por %p33, %p34
      %p36 = scmp.ne.s32.totalorder %s25, %s28
      %p37 = scmp.eq.s32.totalorder %s20, 1
      %p38 = por %p36, %p37
      %p39 = scmp.ne.s32.totalorder %s28, %s29
      %p40 = scmp.eq.s32.totalorder %s20, 0
      %p41 = por %p39, %p40
      %p42 = scmp.ne.s32.totalorder %s28, %s29
      %p43 = scmp.eq.s32.totalorder %s21, 1
      %p44 = por %p42, %p43
      %p46 = scmp.ne.s32.totalorder %s29, %s45
      %p47 = scmp.eq.s32.totalorder %s21, 0
      %p48 = por %p46, %p47
      %s49 = ssub.s32 %s15, %s22
      %p50 = scmp.eq.s32.totalorder %s49, 0
      %s52 = sadd.s32 %s51, 1
      %s53 = scalar_select %p50, %s51, %s52
      %p56 = pneg %p50
      %p57 = scmp.eq.s32.totalorder %s15, 1
      %p58 = por %p56, %p57
      %p59 = scmp.ne.s32.totalorder %s51, %s54
      %p60 = scmp.eq.s32.totalorder %s15, 0
      %p61 = por %p59, %p60
      %p62 = scmp.ne.s32.totalorder %s51, %s54
      %p63 = scmp.eq.s32.totalorder %s20, 1
      %p64 = por %p62, %p63
      %p65 = scmp.ne.s32.totalorder %s54, %s55
      %p66 = scmp.eq.s32.totalorder %s20, 0
      %p67 = por %p65, %p66
      %p68 = scmp.ne.s32.totalorder %s54, %s55
      %p69 = scmp.eq.s32.totalorder %s21, 1
      %p70 = por %p68, %p69
      %p72 = scmp.ne.s32.totalorder %s55, %s71
      %p73 = scmp.eq.s32.totalorder %s21, 0
      %p74 = por %p72, %p73
      %s75 = ssub.s32 %s15, %s22
      %p76 = scmp.eq.s32.totalorder %s75, 0
      %s78 = sadd.s32 %s77, 1
      %s79 = scalar_select %p76, %s77, %s78
      %p82 = pneg %p76
      %p83 = scmp.eq.s32.totalorder %s15, 1
      %p84 = por %p82, %p83
      %p85 = scmp.ne.s32.totalorder %s77, %s80
      %p86 = scmp.eq.s32.totalorder %s15, 0
      %p87 = por %p85, %p86
      %p88 = scmp.ne.s32.totalorder %s77, %s80
      %p89 = scmp.eq.s32.totalorder %s20, 1
      %p90 = por %p88, %p89
      %p91 = scmp.ne.s32.totalorder %s80, %s81
      %p92 = scmp.eq.s32.totalorder %s20, 0
      %p93 = por %p91, %p92
      %p94 = scmp.ne.s32.totalorder %s80, %s81
      %p95 = scmp.eq.s32.totalorder %s21, 1
      %p96 = por %p94, %p95
      %p98 = scmp.ne.s32.totalorder %s81, %s97
      %p99 = scmp.eq.s32.totalorder %s21, 0
      %p100 = por %p98, %p99
      %s101 = ssub.s32 %s15, %s22
      %p102 = scmp.eq.s32.totalorder %s101, 0
      %s104 = sadd.s32 %s103, 1
      %s105 = scalar_select %p102, %s103, %s104
      %p108 = pneg %p102
      %p109 = scmp.eq.s32.totalorder %s15, 1
      %p110 = por %p108, %p109
      %p111 = scmp.ne.s32.totalorder %s103, %s106
      %p112 = scmp.eq.s32.totalorder %s15, 0
      %p113 = por %p111, %p112
      %p114 = scmp.ne.s32.totalorder %s103, %s106
      %p115 = scmp.eq.s32.totalorder %s20, 1
      %p116 = por %p114, %p115
      %p117 = scmp.ne.s32.totalorder %s106, %s107
      %p118 = scmp.eq.s32.totalorder %s20, 0
      %p119 = por %p117, %p118
      %p120 = scmp.ne.s32.totalorder %s106, %s107
      %p121 = scmp.eq.s32.totalorder %s21, 1
      %p122 = por %p120, %p121
      %p124 = scmp.ne.s32.totalorder %s107, %s123
      %p125 = scmp.eq.s32.totalorder %s21, 0
      %p126 = por %p124, %p125
      %p127 = scmp.le.s32.totalorder 1, %s15
      %p128 = scmp.lt.s32.totalorder %s15, 3
      %p129 = pnand %p127, %p128
      %p130 = pneg %p129
      // Predicated region
      $region9: #{stereo_crw_loss.1} parent=5 // pred_check
        _
      $region10: #{stereo_crw_loss.1} parent=5 // pred_check_branch
        %132 = sbr.rel (%p129) target = $region12
      $region11: #{stereo_crw_loss.1} parent=5 // pred_region
        %s133 = ssub.s32 %s15, 1
      $region12: #{stereo_crw_loss.1} parent=5 // pred_fallthru
        _
      %p134 = scmp.lt.s32.totalorder %s15, 2
      // Predicated region
      $region13: #{stereo_crw_loss.1} parent=5 // pred_check
        %p135 = pneg %p134
      $region14: #{stereo_crw_loss.1} parent=5 // pred_check_branch
        %137 = sbr.rel (%p135) target = $region16
      $region15: #{stereo_crw_loss.1} parent=5 // pred_region
        // Predicated region
        $region17: #{stereo_crw_loss.1} parent=15 // pred_check
          %p138 = pneg %p35
        $region18: #{stereo_crw_loss.1} parent=15 // pred_check_branch
          %140 = sbr.rel (%p138) target = $region20
        $region19: #{stereo_crw_loss.1} parent=15 // pred_region
          %s141 = sand.u32 %s25, 1
          %s142 = scalar_lea.sflag [#allocation3], %s141
          %s143 = sand.u32 %s25, 1
          %s144 = smul.addr %s143, 8
          %s145 = scalar_lea.vmem [#allocation2], %s144
          %147 = vsyncadd %s142, 0
          %s148 = smul.addr %s15, 8
          %s149 = scalar_lea.hbm %s0, %s148
          %s151 = sshll.u32 %s149, 4
          %s152 = int_to_ptr.hbm [resolvable:$true] %s151
          %s153 = sshll.u32 %s145, 4
          %s154 = int_to_ptr.vmem [resolvable:$true] %s153
          %156 = dma.hbm_to_vmem [thread:$0]  %s152, 128, %s154, %s142
        $region20: #{stereo_crw_loss.1} parent=15 // pred_fallthru
          _
        // Predicated region
        $region21: #{stereo_crw_loss.1} parent=15 // pred_check
          %p157 = pneg %p61
        $region22: #{stereo_crw_loss.1} parent=15 // pred_check_branch
          %159 = sbr.rel (%p157) target = $region24
        $region23: #{stereo_crw_loss.1} parent=15 // pred_region
          %s160 = sand.u32 %s15, 1
          %s161 = scalar_lea.sflag [#allocation5], %s160
          %s162 = sand.u32 %s51, 1
          %s163 = smul.addr %s162, 8
          %s164 = scalar_lea.vmem [#allocation4], %s163
          %166 = vsyncadd %s161, 0
          %s167 = smul.addr %s15, 8
          %s168 = scalar_lea.hbm %s1, %s167
          %s170 = sshll.u32 %s168, 4
          %s171 = int_to_ptr.hbm [resolvable:$true] %s170
          %s172 = sshll.u32 %s164, 4
          %s173 = int_to_ptr.vmem [resolvable:$true] %s172
          %175 = dma.hbm_to_vmem [thread:$0]  %s171, 128, %s173, %s161
        $region24: #{stereo_crw_loss.1} parent=15 // pred_fallthru
          _
        // Predicated region
        $region25: #{stereo_crw_loss.1} parent=15 // pred_check
          %p176 = pneg %p87
        $region26: #{stereo_crw_loss.1} parent=15 // pred_check_branch
          %178 = sbr.rel (%p176) target = $region28
        $region27: #{stereo_crw_loss.1} parent=15 // pred_region
          %s179 = sand.u32 %s15, 1
          %s180 = scalar_lea.sflag [#allocation5], %s179
          %s181 = sand.u32 %s77, 1
          %s182 = scalar_lea.vmem [#allocation6], %s181
          %184 = vsyncadd %s180, 0
          %s185 = scalar_lea.hbm %s2, %s15
          %s187 = sshll.u32 %s185, 4
          %s188 = int_to_ptr.hbm [resolvable:$true] %s187
          %s189 = sshll.u32 %s182, 4
          %s190 = int_to_ptr.vmem [resolvable:$true] %s189
          %192 = dma.hbm_to_vmem [thread:$0]  %s188, 16, %s190, %s180
        $region28: #{stereo_crw_loss.1} parent=15 // pred_fallthru
          _
      $region16: #{stereo_crw_loss.1} parent=5 // pred_fallthru
        _
      %p193 = scmp.le.s32.totalorder 1, %s15
      %p194 = scmp.lt.s32.totalorder %s15, 3
      %p195 = pnand %p193, %p194
      %p196 = pneg %p195
      // Predicated region
      $region29: #{stereo_crw_loss.1} parent=5 // pred_check
        _
      $region30: #{stereo_crw_loss.1} parent=5 // pred_check_branch
        %198 = sbr.rel (%p195) target = $region32
      $region31: #{stereo_crw_loss.1} parent=5 // pred_region
        %s199 = ssub.s32 %s15, 1
        %s200 = sand.u32 %s28, 1
        %s201 = scalar_lea.sflag [#allocation3], %s200
        %s202 = sand.u32 %s28, 1
        %s203 = smul.addr %s202, 8
        %s204 = scalar_lea.vmem [#allocation2], %s203
        // Predicated region
        $region33: #{stereo_crw_loss.1} parent=31 // pred_check
          %p205 = pneg %p41
        $region34: #{stereo_crw_loss.1} parent=31 // pred_check_branch
          %207 = sbr.rel (%p205) target = $region36
        $region35: #{stereo_crw_loss.1} parent=31 // pred_region
          %209 = dma.done %s201, 128
        $region36: #{stereo_crw_loss.1} parent=31 // pred_fallthru
          _
        %s210 = sand.u32 %s20, 1
        %s211 = scalar_lea.sflag [#allocation5], %s210
        %s212 = sand.u32 %s54, 1
        %s213 = smul.addr %s212, 8
        %s214 = scalar_lea.vmem [#allocation4], %s213
        // Predicated region
        $region37: #{stereo_crw_loss.1} parent=31 // pred_check
          %p215 = pneg %p67
        $region38: #{stereo_crw_loss.1} parent=31 // pred_check_branch
          %217 = sbr.rel (%p215) target = $region40
        $region39: #{stereo_crw_loss.1} parent=31 // pred_region
          %219 = dma.done %s211, 128
        $region40: #{stereo_crw_loss.1} parent=31 // pred_fallthru
          _
        %s220 = sand.u32 %s20, 1
        %s221 = scalar_lea.sflag [#allocation5], %s220
        %s222 = sand.u32 %s80, 1
        %s223 = scalar_lea.vmem [#allocation6], %s222
        // Predicated region
        $region41: #{stereo_crw_loss.1} parent=31 // pred_check
          %p224 = pneg %p93
        $region42: #{stereo_crw_loss.1} parent=31 // pred_check_branch
          %226 = sbr.rel (%p224) target = $region44
        $region43: #{stereo_crw_loss.1} parent=31 // pred_region
          %228 = dma.done %s221, 16
        $region44: #{stereo_crw_loss.1} parent=31 // pred_fallthru
          _
        %s229 = sand.u32 %s28, 1
        %s230 = scalar_lea.sflag [#allocation3], %s229
        %s231 = sand.u32 %s28, 1
        %s232 = smul.addr %s231, 8
        %s233 = scalar_lea.vmem [#allocation2], %s232
        %p234 = pneg %p41
        %p235 = pneg %p38
        %s236 = sand.u32 %s20, 1
        %s237 = scalar_lea.sflag [#allocation5], %s236
        %s238 = sand.u32 %s54, 1
        %s239 = smul.addr %s238, 8
        %s240 = scalar_lea.vmem [#allocation4], %s239
        %p241 = pneg %p67
        %p242 = pneg %p64
        %s243 = sand.u32 %s20, 1
        %s244 = scalar_lea.sflag [#allocation5], %s243
        %s245 = sand.u32 %s80, 1
        %s246 = scalar_lea.vmem [#allocation6], %s245
        %p247 = pneg %p93
        %p248 = pneg %p90
        %p249 = pneg %p119
        %p250 = pneg %p116
        %p251 = scmp.lt.s32.totalorder %s20, 1
        %s252 = scalar_select %p251, %s20, 1
        %s253 = scalar_lea.vmem %s3, %s252
        %p254 = scmp.lt.s32.totalorder %s20, 1
        %s255 = scalar_select %p254, %s20, 1
        %s256 = scalar_lea.vmem %s3, %s255
        %v257 = vld [vmem:[%s204] sm:$0xff]
        %v258 = vld [vmem:[%s214] sm:$0xff]
        %v259 = vmul.f32 %v257, %v257
        %vm260 = vcmask 261120
        %v261 = vsel %vm260, %v259, 0.0
        %262 = vadd.xlane.f32.xlu0 %v261
        %v263 = vpop.xlane.xlu0 %262
        %v264 = vmax.f32 %v263, 1e-24
        %v265 = vrsqrt.pop %v264
        %v266 = vmul.f32 %v265, %v264
        %v267 = vmul.f32 %v266, %v265
        %v268 = vmul.f32 0.5, %v267
        %v269 = vsub.f32 1.5, %v268
        %v270 = vmul.f32 %v265, %v269
        %vm271 = vweird.f32 %v264
        %vm272 = vweird.f32 %v265
        %vm273 = vmor %vm271, %vm272
        %v274 = vsel %vm273, %v265, %v270
        %v275 = vmul.f32 %v257, %v274
        %v276 = vmul.f32 %v258, %v258
        %v277 = vsel %vm260, %v276, 0.0
        %278 = vadd.xlane.f32.xlu0 %v277
        %v279 = vpop.xlane.xlu0 %278
        %v280 = vmax.f32 %v279, 1e-24
        %v281 = vrsqrt.pop %v280
        %v282 = vmul.f32 %v281, %v280
        %v283 = vmul.f32 %v282, %v281
        %v284 = vmul.f32 0.5, %v283
        %v285 = vsub.f32 1.5, %v284
        %v286 = vmul.f32 %v281, %v285
        %vm287 = vweird.f32 %v280
        %vm288 = vweird.f32 %v281
        %vm289 = vmor %vm287, %vm288
        %v290 = vsel %vm289, %v281, %v286
        %v291 = vmul.f32 %v258, %v290
        %v293 = vsel %vm260, %v275, 0
        %v296 = vsel %vm260, %v291, 0
        %298 = vmatpush.xpose.msra.mxu0 0.0
        %299 = vmatpush.xpose.msra.mxu0 0.0
        %300 = vmatpush.xpose.msra.mxu0 0.0
        %301 = vmatpush.xpose.msra.mxu0 0.0
        %302 = vmatpush.xpose.msra.mxu0 0.0
        %303 = vmatpush.xpose.msra.mxu0 0.0
        %304 = vmatpush.xpose.msra.mxu0 0.0
        %305 = vmatpush.xpose.msra.mxu0 0.0
        %306 = vmatpush.xpose.msra.mxu0 0.0
        %307 = vmatpush.xpose.msra.mxu0 0.0
        %308 = vmatpush.xpose.msra.mxu0 0.0
        %309 = vmatpush.xpose.msra.mxu0 0.0
        %310 = vmatpush.xpose.msra.mxu0 0.0
        %311 = vmatpush.xpose.msra.mxu0 0.0
        %312 = vmatpush.xpose.msra.mxu0 0.0
        %313 = vmatpush.xpose.msra.mxu0 %v296
        %314 = vmatmul.f32.gmra.mxu0 %v293
        %v315 = vpop.f32.mrf.mxu0
        %v316 = vadd.f32 0.0, %v315
        %317 = vdwg.mxu0
        %v318 = vmul.f32 %v316, 20.0
        %319 = vxpose.xlu0.b32.start [1/16] %v318, 128
        %320 = vxpose.xlu0.b32.cont [2/16] 0.0, 128
        %321 = vxpose.xlu0.b32.cont [3/16] 0.0, 128
        %322 = vxpose.xlu0.b32.cont [4/16] 0.0, 128
        %323 = vxpose.xlu0.b32.cont [5/16] 0.0, 128
        %324 = vxpose.xlu0.b32.cont [6/16] 0.0, 128
        %325 = vxpose.xlu0.b32.cont [7/16] 0.0, 128
        %326 = vxpose.xlu0.b32.cont [8/16] 0.0, 128
        %327 = vxpose.xlu0.b32.cont [9/16] 0.0, 128
        %328 = vxpose.xlu0.b32.cont [10/16] 0.0, 128
        %329 = vxpose.xlu0.b32.cont [11/16] 0.0, 128
        %330 = vxpose.xlu0.b32.cont [12/16] 0.0, 128
        %331 = vxpose.xlu0.b32.cont [13/16] 0.0, 128
        %332 = vxpose.xlu0.b32.cont [14/16] 0.0, 128
        %333 = vxpose.xlu0.b32.cont [15/16] 0.0, 128
        %334 = vxpose.xlu0.b32.end [16/16] 0.0, 128
        %v335 = vpop.trf.xlu0
        %v336 = vpop.trf.xlu0
        %v337 = vpop.trf.xlu0
        %v338 = vpop.trf.xlu0
        %v339 = vpop.trf.xlu0
        %v340 = vpop.trf.xlu0
        %v341 = vpop.trf.xlu0
        %v342 = vpop.trf.xlu0
        %v343 = vpop.trf.xlu0
        %v344 = vpop.trf.xlu0
        %v345 = vpop.trf.xlu0
        %v346 = vpop.trf.xlu0
        %v347 = vpop.trf.xlu0
        %v348 = vpop.trf.xlu0
        %v349 = vpop.trf.xlu0
        %v350 = vpop.trf.xlu0
        %v351 = vmul.f32 %v318, 1.442695
        %v352 = vpow.pop %v351
        %vm353 = vcmask 64512
        %v354 = vsel %vm353, %v352, 0.0
        %355 = vadd.xlane.f32.xlu0 %v354
        %v356 = vpop.xlane.xlu0 %355
        %v357 = vrcp.pop %v356
        %v358 = vmul.f32 %v352, %v357
        %v359 = vmul.f32 %v335, 1.442695
        %v360 = vpow.pop %v359
        %v361 = vsel %vm353, %v360, 0.0
        %362 = vadd.xlane.f32.xlu0 %v361
        %v363 = vpop.xlane.xlu0 %362
        %v364 = vrcp.pop %v363
        %v365 = vmul.f32 %v360, %v364
        %v366 = vlaneseq
        %v367 = vshrl.u32 %v366, 7
        %v368 = vlaneseq
        %v369 = vand.u32 %v368, 127
        %v371 = vsel %vm353, %v358, 0
        %373 = vmatpush.msra.mxu0 0.0
        %374 = vmatpush.msra.mxu0 0.0
        %375 = vmatpush.msra.mxu0 0.0
        %376 = vmatpush.msra.mxu0 0.0
        %377 = vmatpush.msra.mxu0 0.0
        %378 = vmatpush.msra.mxu0 0.0
        %379 = vmatpush.msra.mxu0 0.0
        %380 = vmatpush.msra.mxu0 0.0
        %381 = vmatpush.msra.mxu0 0.0
        %382 = vmatpush.msra.mxu0 0.0
        %383 = vmatpush.msra.mxu0 0.0
        %384 = vmatpush.msra.mxu0 0.0
        %385 = vmatpush.msra.mxu0 0.0
        %386 = vmatpush.msra.mxu0 0.0
        %387 = vmatpush.msra.mxu0 0.0
        %388 = vmatpush.msra.mxu0 %v365
        %389 = vmatmul.f32.gmra.mxu0 %v371
        %v390 = vpop.f32.mrf.mxu0
        %v391 = vadd.f32 0.0, %v390
        %392 = vdwg.mxu0
        %v393 = vsel %vm353, %v391, 0.0
        %394 = vadd.xlane.f32.xlu0 %v393
        %v395 = vpop.xlane.xlu0 %394
        %v397 = vperm.slane %v395, %v369
        %vm398 = vcmask 1042434
        %v399 = vsel %vm398, %v397, %v397
        %vm400 = vcmask 1043459
        %v401 = vsel %vm400, %v397, %v399
        %vm402 = vcmask 1044484
        %v403 = vsel %vm402, %v397, %v401
        %vm404 = vcmask 1045509
        %v405 = vsel %vm404, %v397, %v403
        %vm406 = vcmask 1046534
        %v407 = vsel %vm406, %v397, %v405
        %vm408 = vcmask 1047559
        %v409 = vsel %vm408, %v397, %v407
        %v411 = vmul.f32 %v391, %v409
        %v412 = vsel %vm353, %v411, 0.0
        %413 = vadd.xlane.f32.xlu0 %v412
        %v414 = vpop.xlane.xlu0 %413
        %415 = vxpose.xlu0.b32.start [1/16] %v391, 128
        %416 = vxpose.xlu0.b32.cont [2/16] 0.0, 128
        %417 = vxpose.xlu0.b32.cont [3/16] 0.0, 128
        %418 = vxpose.xlu0.b32.cont [4/16] 0.0, 128
        %419 = vxpose.xlu0.b32.cont [5/16] 0.0, 128
        %420 = vxpose.xlu0.b32.cont [6/16] 0.0, 128
        %421 = vxpose.xlu0.b32.cont [7/16] 0.0, 128
        %422 = vxpose.xlu0.b32.cont [8/16] 0.0, 128
        %423 = vxpose.xlu0.b32.cont [9/16] 0.0, 128
        %424 = vxpose.xlu0.b32.cont [10/16] 0.0, 128
        %425 = vxpose.xlu0.b32.cont [11/16] 0.0, 128
        %426 = vxpose.xlu0.b32.cont [12/16] 0.0, 128
        %427 = vxpose.xlu0.b32.cont [13/16] 0.0, 128
        %428 = vxpose.xlu0.b32.cont [14/16] 0.0, 128
        %429 = vxpose.xlu0.b32.cont [15/16] 0.0, 128
        %430 = vxpose.xlu0.b32.end [16/16] 0.0, 128
        %v431 = vpop.trf.xlu0
        %v432 = vpop.trf.xlu0
        %v433 = vpop.trf.xlu0
        %v434 = vpop.trf.xlu0
        %v435 = vpop.trf.xlu0
        %v436 = vpop.trf.xlu0
        %v437 = vpop.trf.xlu0
        %v438 = vpop.trf.xlu0
        %v439 = vpop.trf.xlu0
        %v440 = vpop.trf.xlu0
        %v441 = vpop.trf.xlu0
        %v442 = vpop.trf.xlu0
        %v443 = vpop.trf.xlu0
        %v444 = vpop.trf.xlu0
        %v445 = vpop.trf.xlu0
        %v446 = vpop.trf.xlu0
        %v447 = vmul.f32 %v391, %v431
        %v448 = vsel %vm353, %v447, 0.0
        %449 = vadd.xlane.f32.xlu0 %v448
        %v450 = vpop.xlane.xlu0 %449
        %v451 = vadd.f32 %v414, 8e-20
        %v452 = vlog2.pop %v451
        %v453 = vmul.f32 %v452, 0.6931472
        %v454 = vadd.f32 %v450, 1e-20
        %v455 = vlog2.pop %v454
        %v456 = vmul.f32 %v455, 0.6931472
        %v457 = vsub.f32 %v453, %v456
        %vm458 = vcmp.ge.s32.totalorder %v369, 0
        %vm459 = vcmp.lt.s32.totalorder %v369, 8
        %vm460 = vmand %vm458, %vm459
        %v462 = vperm.slane %v457, %v369
        %v464 = vsel %vm460, %v462, 0.0
        %vm465 = vcmask 57344
        %v466 = vsel %vm465, %v464, 0.0
        %467 = vadd.xlane.f32.xlu0 %v466
        %v468 = vpop.xlane.xlu0 %467
        %v469 = vrot.slane %v468, 4
        %v470 = vadd.f32 %v468, %v469
        %v471 = vrot.slane %v470, 2
        %v472 = vadd.f32 %v470, %v471
        %v473 = vrot.slane %v472, 1
        %v474 = vadd.f32 %v472, %v473
        %s475 = vtos %v474
        %v477 = vsel %vm353, %v365, 0
        %479 = vmatpush.msra.mxu0 0.0
        %480 = vmatpush.msra.mxu0 0.0
        %481 = vmatpush.msra.mxu0 0.0
        %482 = vmatpush.msra.mxu0 0.0
        %483 = vmatpush.msra.mxu0 0.0
        %484 = vmatpush.msra.mxu0 0.0
        %485 = vmatpush.msra.mxu0 0.0
        %486 = vmatpush.msra.mxu0 0.0
        %487 = vmatpush.msra.mxu0 0.0
        %488 = vmatpush.msra.mxu0 0.0
        %489 = vmatpush.msra.mxu0 0.0
        %490 = vmatpush.msra.mxu0 0.0
        %491 = vmatpush.msra.mxu0 0.0
        %492 = vmatpush.msra.mxu0 0.0
        %493 = vmatpush.msra.mxu0 0.0
        %494 = vmatpush.msra.mxu0 %v358
        %495 = vmatmul.f32.gmra.mxu0 %v477
        %v496 = vpop.f32.mrf.mxu0
        %v497 = vadd.f32 0.0, %v496
        %498 = vdwg.mxu0
        %v499 = vsel %vm353, %v497, 0.0
        %500 = vadd.xlane.f32.xlu0 %v499
        %v501 = vpop.xlane.xlu0 %500
        %v503 = vperm.slane %v501, %v369
        %v504 = vsel %vm398, %v503, %v503
        %v505 = vsel %vm400, %v503, %v504
        %v506 = vsel %vm402, %v503, %v505
        %v507 = vsel %vm404, %v503, %v506
        %v508 = vsel %vm406, %v503, %v507
        %v509 = vsel %vm408, %v503, %v508
        %v511 = vmul.f32 %v497, %v509
        %v512 = vsel %vm353, %v511, 0.0
        %513 = vadd.xlane.f32.xlu0 %v512
        %v514 = vpop.xlane.xlu0 %513
        %515 = vxpose.xlu0.b32.start [1/16] %v497, 128
        %516 = vxpose.xlu0.b32.cont [2/16] 0.0, 128
        %517 = vxpose.xlu0.b32.cont [3/16] 0.0, 128
        %518 = vxpose.xlu0.b32.cont [4/16] 0.0, 128
        %519 = vxpose.xlu0.b32.cont [5/16] 0.0, 128
        %520 = vxpose.xlu0.b32.cont [6/16] 0.0, 128
        %521 = vxpose.xlu0.b32.cont [7/16] 0.0, 128
        %522 = vxpose.xlu0.b32.cont [8/16] 0.0, 128
        %523 = vxpose.xlu0.b32.cont [9/16] 0.0, 128
        %524 = vxpose.xlu0.b32.cont [10/16] 0.0, 128
        %525 = vxpose.xlu0.b32.cont [11/16] 0.0, 128
        %526 = vxpose.xlu0.b32.cont [12/16] 0.0, 128
        %527 = vxpose.xlu0.b32.cont [13/16] 0.0, 128
        %528 = vxpose.xlu0.b32.cont [14/16] 0.0, 128
        %529 = vxpose.xlu0.b32.cont [15/16] 0.0, 128
        %530 = vxpose.xlu0.b32.end [16/16] 0.0, 128
        %v531 = vpop.trf.xlu0
        %v532 = vpop.trf.xlu0
        %v533 = vpop.trf.xlu0
        %v534 = vpop.trf.xlu0
        %v535 = vpop.trf.xlu0
        %v536 = vpop.trf.xlu0
        %v537 = vpop.trf.xlu0
        %v538 = vpop.trf.xlu0
        %v539 = vpop.trf.xlu0
        %v540 = vpop.trf.xlu0
        %v541 = vpop.trf.xlu0
        %v542 = vpop.trf.xlu0
        %v543 = vpop.trf.xlu0
        %v544 = vpop.trf.xlu0
        %v545 = vpop.trf.xlu0
        %v546 = vpop.trf.xlu0
        %v547 = vmul.f32 %v497, %v531
        %v548 = vsel %vm353, %v547, 0.0
        %549 = vadd.xlane.f32.xlu0 %v548
        %v550 = vpop.xlane.xlu0 %549
        %v551 = vadd.f32 %v514, 8e-20
        %v552 = vlog2.pop %v551
        %v553 = vmul.f32 %v552, 0.6931472
        %v554 = vadd.f32 %v550, 1e-20
        %v555 = vlog2.pop %v554
        %v556 = vmul.f32 %v555, 0.6931472
        %v557 = vsub.f32 %v553, %v556
        %v559 = vperm.slane %v557, %v369
        %v561 = vsel %vm460, %v559, 0.0
        %v562 = vsel %vm465, %v561, 0.0
        %563 = vadd.xlane.f32.xlu0 %v562
        %v564 = vpop.xlane.xlu0 %563
        %v565 = vrot.slane %v564, 4
        %v566 = vadd.f32 %v564, %v565
        %v567 = vrot.slane %v566, 2
        %v568 = vadd.f32 %v566, %v567
        %v569 = vrot.slane %v568, 1
        %v570 = vadd.f32 %v568, %v569
        %s571 = vtos %v570
        %s572 = sadd.f32 %s475, %s571
        %v573 = vsub.s32 %v367, %v369
        %vm574 = vcmp.lt.s32.totalorder %v573, 0
        %v575 = vsub.s32 0, %v573
        %v576 = vsel %vm574, %v575, %v573
        %vm577 = vcmp.le.s32.totalorder %v576, 0
        %vm578 = vcmp.ne.f32.partialorder %v318, 0.0
        %vm579 = vmand %vm577, %vm578
        %v580 = vsel %vm579, %v318, -1e+20
        %v581 = vmul.f32 %v580, 1.442695
        %v582 = vpow.pop %v581
        %v583 = vsel %vm353, %v582, 0.0
        %584 = vadd.xlane.f32.xlu0 %v583
        %v585 = vpop.xlane.xlu0 %584
        %v586 = vrcp.pop %v585
        %v587 = vmul.f32 %v582, %v586
        %v588 = vld [vmem:[%s223] sm:$0x1]
        %v589 = vmul.f32 %v588, 16000.0
        %v591 = vperm.slane %v589, 0
        %v593 = vmul.f32 %v587, %v591
        %v594 = vsel %vm353, %v593, 0.0
        %595 = vadd.xlane.f32.xlu0 %v594
        %v596 = vpop.xlane.xlu0 %595
        %v598 = vrot.slane %v596, 1
        %v600 = vsub.f32 %v596, %v598
        %v601 = vand.u32 2147483647, %v600
        %vm602 = vcmp.lt.f32.partialorder %v601, 1.0
        %v603 = vmul.f32 %v600, 0.5
        %v604 = vmul.f32 %v603, %v600
        %v605 = vsub.f32 %v601, 0.5
        %v606 = vsel %vm602, %v604, %v605
        %vm607 = vcmp.lt.s32.totalorder %v369, 7
        %vm608 = vmand %vm458, %vm607
        %610 = vset.pattern.permute.xlu0 0
        %611 = vperm.xlu0 %610, %v606
        %v612 = vpop.permute.xlu0 %611
        %v613 = vperm.slane %v612, %v369
        %v615 = vsel %vm608, %v613, 0.0
        %vm616 = vcmask 49152
        %v617 = vsel %vm616, %v615, 0.0
        %618 = vadd.xlane.f32.xlu0 %v617
        %v619 = vpop.xlane.xlu0 %618
        %v620 = vrot.slane %v619, 4
        %v621 = vadd.f32 %v619, %v620
        %v622 = vrot.slane %v621, 2
        %v623 = vadd.f32 %v621, %v622
        %v624 = vrot.slane %v623, 1
        %v625 = vadd.f32 %v623, %v624
        %s626 = vtos %v625
        %vm627 = vcmp.eq.s32.totalorder %v369, 0
        %vm628 = vcmp.eq.s32.totalorder %v369, 1
        %v629 = vstv %s626
        %v630 = vsel %vm628, %v629, 0.0
        %v631 = vstv %s572
        %v632 = vsel %vm627, %v631, %v630
        %633 = vst [vmem:[%s256] sm:$0x1] %v632
        %p634 = scmp.lt.s32.totalorder %s20, 1
        %s635 = scalar_select %p634, %s20, 1
        %s636 = scalar_lea.vmem %s3, %s635
        // Predicated region
        $region45: #{stereo_crw_loss.1} parent=31 // pred_check
          %p637 = pneg %p116
        $region46: #{stereo_crw_loss.1} parent=31 // pred_check_branch
          %639 = sbr.rel (%p637) target = $region48
        $region47: #{stereo_crw_loss.1} parent=31 // pred_region
          _
        $region48: #{stereo_crw_loss.1} parent=31 // pred_fallthru
          _
      $region32: #{stereo_crw_loss.1} parent=5 // pred_fallthru
        _
      %p640 = scmp.le.s32.totalorder 2, %s15
      // Predicated region
      $region49: #{stereo_crw_loss.1} parent=5 // pred_check
        %p641 = pneg %p640
      $region50: #{stereo_crw_loss.1} parent=5 // pred_check_branch
        %643 = sbr.rel (%p641) target = $region52
      $region51: #{stereo_crw_loss.1} parent=5 // pred_region
        %s644 = ssub.s32 %s15, 2
        // Predicated region
        $region53: #{stereo_crw_loss.1} parent=51 // pred_check
          %p645 = pneg %p122
        $region54: #{stereo_crw_loss.1} parent=51 // pred_check_branch
          %647 = sbr.rel (%p645) target = $region56
        $region55: #{stereo_crw_loss.1} parent=51 // pred_region
          %p648 = scmp.lt.s32.totalorder %s21, 1
          %s649 = scalar_select %p648, %s21, 1
          %s650 = scalar_lea.vmem %s3, %s649
        $region56: #{stereo_crw_loss.1} parent=51 // pred_fallthru
          _
      $region52: #{stereo_crw_loss.1} parent=5 // pred_fallthru
        _
    $region6: #{stereo_crw_loss.1} parent=1 // loop_footer
      %s19 = sadd.s32 1, %s15
    $region7: #{stereo_crw_loss.1} parent=1 // loop_footer_branch
      %14 = sbr.rel target = $region3
    $region8: #{stereo_crw_loss.1} parent=1 // loop_exit
      _
    %651 = vsyncpa [#allocation3], 1
    %s652 = scalar_lea.sflag [#allocation3], 1
    %653 = vsyncpa %s652, 1
    %654 = vsyncpa [#allocation5], 1
    %s655 = scalar_lea.sflag [#allocation5], 1
    %656 = vsyncpa %s655, 1

</llo_original>
